<compile_context>
chip_gen: v5e
topology: v5e:2x2
jax: 0.10.0
libtpu: 0.0.40
codegen_flags: <defaults>
</compile_context>

<pallas_src>
import jax
import jax.numpy as jnp
from jax.experimental import pallas as pl
from jax.experimental.pallas import tpu as pltpu


def roger_mlp_kernel(x_ref, w1_ref, b1_ref, w2_ref, b2_ref, w3_ref, b3_ref, o_ref):
    # fc1 + ReLU (MXU matmul, f32 accumulation; bias/ReLU in f32 on the VPU)
    h1 = jnp.dot(x_ref[...], w1_ref[...], preferred_element_type=jnp.float32)
    h1 = jnp.maximum(h1 + b1_ref[...], 0.0)
    # fc2 + ReLU (two_hidden branch active by default: hidden_size_2=16)
    h2 = jnp.dot(h1.astype(w2_ref.dtype), w2_ref[...],
                 preferred_element_type=jnp.float32)
    h2 = jnp.maximum(h2 + b2_ref[...], 0.0)
    # fc3 (final projection to output_size=6, no activation)
    out = jnp.dot(h2.astype(w3_ref.dtype), w3_ref[...],
                  preferred_element_type=jnp.float32)
    o_ref[...] = (out + b3_ref[...]).astype(o_ref.dtype)


def _round_up(n, m):
    return ((n + m - 1) // m) * m


def roger_model_forward(x, params, *, block_batch=1024, use_bf16=True):
    """x: [B, 84] float32 -> [B, 6] float32."""
    w1, b1, w2, b2, w3, b3 = params
    B, F = x.shape
    h1_size, h2_size, out_size = w1.shape[1], w2.shape[1], w3.shape[1]

    # Batch tile: multiple of 16 (covers bf16 sublane packing and f32's 8),
    # capped at block_batch. Pad B up to a multiple of TB so no ragged last tile.
    TB = min(_round_up(block_batch, 16), _round_up(B, 16))
    B_pad = _round_up(B, TB)
    if B_pad != B:
        x = jnp.pad(x, ((0, B_pad - B), (0, 0)))

    in_dtype = jnp.bfloat16 if use_bf16 else jnp.float32
    x_c = x.astype(in_dtype)
    w1c, w2c, w3c = (w.astype(in_dtype) for w in (w1, w2, w3))
    b1c, b2c, b3c = (b.astype(jnp.float32) for b in (b1, b2, b3))

    # Weights/biases: full-shape block, constant index map -> stay VMEM-resident.
    def resident(a):
        return pl.BlockSpec(a.shape, lambda i: (0,) * a.ndim)

    flops = 2 * B_pad * (F * h1_size + h1_size * h2_size + h2_size * out_size)
    bytes_accessed = (
        B_pad * (F * x_c.dtype.itemsize + out_size * 4)
        + sum(a.size * a.dtype.itemsize for a in (w1c, b1c, w2c, b2c, w3c, b3c))
    )

    out = pl.pallas_call(
        roger_mlp_kernel,
        out_shape=jax.ShapeDtypeStruct((B_pad, out_size), jnp.float32),
        grid=(B_pad // TB,),
        in_specs=[
            pl.BlockSpec((TB, F), lambda i: (i, 0)),  # x tile, pipelined over batch
            resident(w1c), resident(b1c),
            resident(w2c), resident(b2c),
            resident(w3c), resident(b3c),
        ],
        out_specs=pl.BlockSpec((TB, out_size), lambda i: (i, 0)),
        compiler_params=pltpu.CompilerParams(
            dimension_semantics=("parallel",),  # megacore sharding on v7x
        ),
        cost_estimate=pl.CostEstimate(
            flops=flops, transcendentals=0, bytes_accessed=bytes_accessed),
    )(x_c, w1c, b1c, w2c, b2c, w3c, b3c)

    return out[:B]


def init_params(key, input_size=84, h1=32, h2=16, output_size=6):
    """Deterministic init mimicking PyTorch nn.Linear uniform(-1/sqrt(fan_in), 1/sqrt(fan_in))."""
    def linear(k, fan_in, fan_out):
        kw, kb = jax.random.split(k)
        bound = 1.0 / jnp.sqrt(fan_in)
        # stored as [in, out] so the kernel does x @ w
        w = jax.random.uniform(kw, (fan_in, fan_out), jnp.float32, -bound, bound)
        b = jax.random.uniform(kb, (1, fan_out), jnp.float32, -bound, bound)
        return w, b

    k1, k2, k3 = jax.random.split(key, 3)
    w1, b1 = linear(k1, input_size, h1)
    w2, b2 = linear(k2, h1, h2)
    w3, b3 = linear(k3, h2, output_size)
    return (w1, b1, w2, b2, w3, b3)


def reference_forward(x, params):
    w1, b1, w2, b2, w3, b3 = params
    h = jnp.maximum(x @ w1 + b1, 0.0)
    h = jnp.maximum(h @ w2 + b2, 0.0)
    return h @ w3 + b3


if __name__ == "__main__":
    key = jax.random.PRNGKey(0)
    k_x, k_p = jax.random.split(key)

    batch = 8
    input_size = 84
    x = jax.random.normal(k_x, (batch, input_size), jnp.float32)
    params = init_params(k_p, input_size=input_size, h1=32, h2=16, output_size=6)
    ref = reference_forward(x, params)

    # Exact-semantics f32 path (tight tolerance).
    out_f32 = jax.block_until_ready(roger_model_forward(x, params, use_bf16=False))
    assert out_f32.shape == (batch, 6), out_f32.shape
    assert jnp.allclose(out_f32, ref, atol=1e-5, rtol=1e-5), "f32 mismatch vs reference"

    # Performance path: bf16 inputs/weights, f32 accumulation (loose tolerance).
    out_bf16 = jax.block_until_ready(roger_model_forward(x, params, use_bf16=True))
    assert out_bf16.shape == (batch, 6), out_bf16.shape
    assert jnp.allclose(out_bf16, ref, atol=5e-2, rtol=5e-2), "bf16 mismatch vs reference"

    # Ragged batch (exercises wrapper-side padding / tile handling).
    x2 = jax.random.normal(jax.random.PRNGKey(1), (50, input_size), jnp.float32)
    out2 = jax.block_until_ready(roger_model_forward(x2, params, use_bf16=False))
    ref2 = reference_forward(x2, params)
    assert out2.shape == (50, 6), out2.shape
    assert jnp.allclose(out2, ref2, atol=1e-5, rtol=1e-5), "ragged-batch mismatch"

    print("KERNEL_OK")
</pallas_src>

<mosaic_0001>
module attributes {stable_mosaic.version = 11 : i64} {
  func.func @roger_mlp_kernel(%arg0: i32, %arg1: memref<16x84xf32, #tpu.memory_space<vmem>>, %arg2: memref<84x32xf32, #tpu.memory_space<vmem>>, %arg3: memref<1x32xf32, #tpu.memory_space<vmem>>, %arg4: memref<32x16xf32, #tpu.memory_space<vmem>>, %arg5: memref<1x16xf32, #tpu.memory_space<vmem>>, %arg6: memref<16x6xf32, #tpu.memory_space<vmem>>, %arg7: memref<1x6xf32, #tpu.memory_space<vmem>>, %arg8: memref<16x6xf32, #tpu.memory_space<vmem>>) attributes {dimension_semantics = [#tpu.dimension_semantics<parallel>], iteration_bounds = array<i64: 1>, scalar_prefetch = 0 : i64, scratch_operands = 0 : i64, tpu.core_type = #tpu.core_type<tc>, window_params = [{transform_indices = @transform_0, window_bounds = array<i64: 16, 84>}, {pipeline_mode = #tpu.pipeline_mode<synchronous>, transform_indices = @transform_1, window_bounds = array<i64: 84, 32>}, {pipeline_mode = #tpu.pipeline_mode<synchronous>, transform_indices = @transform_2, window_bounds = array<i64: 1, 32>}, {pipeline_mode = #tpu.pipeline_mode<synchronous>, transform_indices = @transform_3, window_bounds = array<i64: 32, 16>}, {pipeline_mode = #tpu.pipeline_mode<synchronous>, transform_indices = @transform_4, window_bounds = array<i64: 1, 16>}, {pipeline_mode = #tpu.pipeline_mode<synchronous>, transform_indices = @transform_5, window_bounds = array<i64: 16, 6>}, {pipeline_mode = #tpu.pipeline_mode<synchronous>, transform_indices = @transform_6, window_bounds = array<i64: 1, 6>}, {transform_indices = @transform_7, window_bounds = array<i64: 16, 6>}]} {
    %c0 = arith.constant 0 : index
    %c0_0 = arith.constant 0 : index
    %0 = vector.load %arg1[%c0, %c0_0] : memref<16x84xf32, #tpu.memory_space<vmem>>, vector<16x84xf32>
    %c0_1 = arith.constant 0 : index
    %c0_2 = arith.constant 0 : index
    %1 = vector.load %arg2[%c0_1, %c0_2] : memref<84x32xf32, #tpu.memory_space<vmem>>, vector<84x32xf32>
    %cst = arith.constant dense<0.000000e+00> : vector<16x32xf32>
    %2 = tpu.matmul %0, %1, %cst {dimension_numbers = #tpu.dot_dimension_numbers<[1], [0], [0], [1], [0, 0, 1, 1], [], []>} : vector<16x84xf32>, vector<84x32xf32>, vector<16x32xf32> -> vector<16x32xf32>
    %c0_3 = arith.constant 0 : index
    %c0_4 = arith.constant 0 : index
    %3 = vector.load %arg3[%c0_3, %c0_4] : memref<1x32xf32, #tpu.memory_space<vmem>>, vector<1x32xf32>
    %4 = vector.broadcast %3 : vector<1x32xf32> to vector<16x32xf32>
    %5 = arith.addf %2, %4 : vector<16x32xf32>
    %cst_5 = arith.constant 0.000000e+00 : f32
    %6 = vector.broadcast %cst_5 : f32 to vector<16x32xf32>
    %7 = arith.maximumf %5, %6 : vector<16x32xf32>
    %c0_6 = arith.constant 0 : index
    %c0_7 = arith.constant 0 : index
    %8 = vector.load %arg4[%c0_6, %c0_7] : memref<32x16xf32, #tpu.memory_space<vmem>>, vector<32x16xf32>
    %cst_8 = arith.constant dense<0.000000e+00> : vector<16x16xf32>
    %9 = tpu.matmul %7, %8, %cst_8 {dimension_numbers = #tpu.dot_dimension_numbers<[1], [0], [0], [1], [0, 0, 1, 1], [], []>} : vector<16x32xf32>, vector<32x16xf32>, vector<16x16xf32> -> vector<16x16xf32>
    %c0_9 = arith.constant 0 : index
    %c0_10 = arith.constant 0 : index
    %10 = vector.load %arg5[%c0_9, %c0_10] : memref<1x16xf32, #tpu.memory_space<vmem>>, vector<1x16xf32>
    %11 = vector.broadcast %10 : vector<1x16xf32> to vector<16x16xf32>
    %12 = arith.addf %9, %11 : vector<16x16xf32>
    %cst_11 = arith.constant 0.000000e+00 : f32
    %13 = vector.broadcast %cst_11 : f32 to vector<16x16xf32>
    %14 = arith.maximumf %12, %13 : vector<16x16xf32>
    %c0_12 = arith.constant 0 : index
    %c0_13 = arith.constant 0 : index
    %15 = vector.load %arg6[%c0_12, %c0_13] : memref<16x6xf32, #tpu.memory_space<vmem>>, vector<16x6xf32>
    %cst_14 = arith.constant dense<0.000000e+00> : vector<16x6xf32>
    %16 = tpu.matmul %14, %15, %cst_14 {dimension_numbers = #tpu.dot_dimension_numbers<[1], [0], [0], [1], [0, 0, 1, 1], [], []>} : vector<16x16xf32>, vector<16x6xf32>, vector<16x6xf32> -> vector<16x6xf32>
    %c0_15 = arith.constant 0 : index
    %c0_16 = arith.constant 0 : index
    %17 = vector.load %arg7[%c0_15, %c0_16] : memref<1x6xf32, #tpu.memory_space<vmem>>, vector<1x6xf32>
    %18 = vector.broadcast %17 : vector<1x6xf32> to vector<16x6xf32>
    %19 = arith.addf %16, %18 : vector<16x6xf32>
    %c0_17 = arith.constant 0 : index
    %c0_18 = arith.constant 0 : index
    %20 = vector.load %arg8[%c0_17, %c0_18] : memref<16x6xf32, #tpu.memory_space<vmem>>, vector<16x6xf32>
    tpu.vector_store %arg8[%c0_17, %c0_18], %19 {strides = array<i32>} : memref<16x6xf32, #tpu.memory_space<vmem>>, vector<16x6xf32>,
    return
  }
  func.func @transform_0(%arg0: i32) -> (i32, i32) {
    %c0_i32 = arith.constant 0 : i32
    %c0_i32_0 = arith.constant 0 : i32
    return %arg0, %c0_i32 : i32, i32
  }
  func.func @transform_1(%arg0: i32) -> (i32, i32) {
    %c0_i32 = arith.constant 0 : i32
    %c0_i32_0 = arith.constant 0 : i32
    %c0_i32_1 = arith.constant 0 : i32
    return %c0_i32, %c0_i32_0 : i32, i32
  }
  func.func @transform_2(%arg0: i32) -> (i32, i32) {
    %c0_i32 = arith.constant 0 : i32
    %c0_i32_0 = arith.constant 0 : i32
    %c0_i32_1 = arith.constant 0 : i32
    return %c0_i32, %c0_i32_0 : i32, i32
  }
  func.func @transform_3(%arg0: i32) -> (i32, i32) {
    %c0_i32 = arith.constant 0 : i32
    %c0_i32_0 = arith.constant 0 : i32
    %c0_i32_1 = arith.constant 0 : i32
    return %c0_i32, %c0_i32_0 : i32, i32
  }
  func.func @transform_4(%arg0: i32) -> (i32, i32) {
    %c0_i32 = arith.constant 0 : i32
    %c0_i32_0 = arith.constant 0 : i32
    %c0_i32_1 = arith.constant 0 : i32
    return %c0_i32, %c0_i32_0 : i32, i32
  }
  func.func @transform_5(%arg0: i32) -> (i32, i32) {
    %c0_i32 = arith.constant 0 : i32
    %c0_i32_0 = arith.constant 0 : i32
    %c0_i32_1 = arith.constant 0 : i32
    return %c0_i32, %c0_i32_0 : i32, i32
  }
  func.func @transform_6(%arg0: i32) -> (i32, i32) {
    %c0_i32 = arith.constant 0 : i32
    %c0_i32_0 = arith.constant 0 : i32
    %c0_i32_1 = arith.constant 0 : i32
    return %c0_i32, %c0_i32_0 : i32, i32
  }
  func.func @transform_7(%arg0: i32) -> (i32, i32) {
    %c0_i32 = arith.constant 0 : i32
    %c0_i32_0 = arith.constant 0 : i32
    return %arg0, %c0_i32 : i32, i32
  }
}

</mosaic_0001>

<llo_original>
// kernel: tpu_custom_call.1
$region0: #{tpu_custom_call.1}
  #allocation0 [shape = 'u32[]', space=smem, size = 0x4, offset = 0x4, fixed_abs, tag = 'smem constant byte address 0x4 - core index']
  #allocation1 [shape = 'u32[72,128]{1,0:T(1,128)}', space=vmem, size = 0x9000, scoped, tag = 'internal scratch']
  %s0 = inlined_call_operand.vmem [shape: f32[16,84], index: 0, kind: input, shape index: {}]
  %s1 = inlined_call_operand.vmem [shape: f32[84,32], index: 1, kind: input, shape index: {}]
  %s2 = inlined_call_operand.vmem [shape: f32[1,32], index: 2, kind: input, shape index: {}]
  %s3 = inlined_call_operand.vmem [shape: f32[32,16], index: 3, kind: input, shape index: {}]
  %s4 = inlined_call_operand.vmem [shape: f32[1,16], index: 4, kind: input, shape index: {}]
  %s5 = inlined_call_operand.vmem [shape: f32[16,6], index: 5, kind: input, shape index: {}]
  %s6 = inlined_call_operand.vmem [shape: f32[1,6], index: 6, kind: input, shape index: {}]
  %s7 = inlined_call_operand.vmem [shape: f32[16,6], index: 7, kind: output, shape index: {}]
  %s8 = sld [smem:[#allocation0]]
  $region38: #{tpu_custom_call.1} parent=0
    _
  %s10 = ssub.s32 1, %s8
  %s11 = scalar_select 0, %s10, %s8
  // Predicated region
  $region2: #{tpu_custom_call.1} parent=0 // pred_check
    _
  $region3: #{tpu_custom_call.1} parent=0 // pred_check_branch
    %13 = sbr.rel (0) target = $region5
  $region4: #{tpu_custom_call.1} parent=0 // pred_region
    _
  $region5: #{tpu_custom_call.1} parent=0 // pred_fallthru
    _
  // Predicated region
  $region6: #{tpu_custom_call.1} parent=0 // pred_check
    _
  $region7: #{tpu_custom_call.1} parent=0 // pred_check_branch
    %15 = sbr.rel (0) target = $region9
  $region8: #{tpu_custom_call.1} parent=0 // pred_region
    _
  $region9: #{tpu_custom_call.1} parent=0 // pred_fallthru
    _
  // Predicated region
  $region10: #{tpu_custom_call.1} parent=0 // pred_check
    _
  $region11: #{tpu_custom_call.1} parent=0 // pred_check_branch
    %17 = sbr.rel (0) target = $region13
  $region12: #{tpu_custom_call.1} parent=0 // pred_region
    _
  $region13: #{tpu_custom_call.1} parent=0 // pred_fallthru
    _
  // Predicated region
  $region14: #{tpu_custom_call.1} parent=0 // pred_check
    _
  $region15: #{tpu_custom_call.1} parent=0 // pred_check_branch
    %19 = sbr.rel (0) target = $region17
  $region16: #{tpu_custom_call.1} parent=0 // pred_region
    _
  $region17: #{tpu_custom_call.1} parent=0 // pred_fallthru
    _
  // Predicated region
  $region18: #{tpu_custom_call.1} parent=0 // pred_check
    _
  $region19: #{tpu_custom_call.1} parent=0 // pred_check_branch
    %21 = sbr.rel (0) target = $region21
  $region20: #{tpu_custom_call.1} parent=0 // pred_region
    _
  $region21: #{tpu_custom_call.1} parent=0 // pred_fallthru
    _
  // Predicated region
  $region22: #{tpu_custom_call.1} parent=0 // pred_check
    _
  $region23: #{tpu_custom_call.1} parent=0 // pred_check_branch
    %23 = sbr.rel (0) target = $region25
  $region24: #{tpu_custom_call.1} parent=0 // pred_region
    _
  $region25: #{tpu_custom_call.1} parent=0 // pred_fallthru
    _
  // Predicated region
  $region26: #{tpu_custom_call.1} parent=0 // pred_check
    _
  $region27: #{tpu_custom_call.1} parent=0 // pred_check_branch
    %25 = sbr.rel (0) target = $region29
  $region28: #{tpu_custom_call.1} parent=0 // pred_region
    _
  $region29: #{tpu_custom_call.1} parent=0 // pred_fallthru
    _
  %v26 = vld [vmem:[%s0] sm:$0xff]
  %v27 = vld [vmem:[%s0 + $0x8] sm:$0xff]
  %v28 = vld [vmem:[%s1] sm:$0xff]
  %v29 = vld [vmem:[%s1 + $0x8] sm:$0xff]
  %v30 = vld [vmem:[%s1 + $0x10] sm:$0xff]
  %v31 = vld [vmem:[%s1 + $0x18] sm:$0xff]
  %v32 = vld [vmem:[%s1 + $0x20] sm:$0xff]
  %v33 = vld [vmem:[%s1 + $0x28] sm:$0xff]
  %v34 = vld [vmem:[%s1 + $0x30] sm:$0xff]
  %v35 = vld [vmem:[%s1 + $0x38] sm:$0xff]
  %v36 = vld [vmem:[%s1 + $0x40] sm:$0xff]
  %v37 = vld [vmem:[%s1 + $0x48] sm:$0xff]
  %v38 = vld [vmem:[%s1 + $0x50] sm:$0xf]
  %v39 = vld [vmem:[%s2] sm:$0x1]
  %v41 = vperm.slane %v39, 0
  %vm43 = vcmask 687104
  %v45 = vsel %vm43, %v26, 0
  %v48 = vsel %vm43, %v27, 0
  %vm50 = vcmask 1043456
  %v52 = vsel %vm50, %v38, 0
  %54 = vmatpush.msra.mxu0 0.0
  %55 = vmatpush.msra.mxu0 0.0
  %56 = vmatpush.msra.mxu0 0.0
  %57 = vmatpush.msra.mxu0 0.0
  %58 = vmatpush.msra.mxu0 0.0
  %59 = vmatpush.msra.mxu0 %v52
  %60 = vmatpush.msra.mxu0 %v37
  %61 = vmatpush.msra.mxu0 %v36
  %62 = vmatpush.msra.mxu0 %v35
  %63 = vmatpush.msra.mxu0 %v34
  %64 = vmatpush.msra.mxu0 %v33
  %65 = vmatpush.msra.mxu0 %v32
  %66 = vmatpush.msra.mxu0 %v31
  %67 = vmatpush.msra.mxu0 %v30
  %68 = vmatpush.msra.mxu0 %v29
  %69 = vmatpush.msra.mxu0 %v28
  %70 = vmatmul.f32.gmra.mxu0 %v45
  %v71 = vpop.f32.mrf.mxu0
  %v72 = vadd.f32 %v41, %v71
  %73 = vmatmul.f32.gmra.mxu0 %v48
  %v74 = vpop.f32.mrf.mxu0
  %v75 = vadd.f32 %v41, %v74
  %76 = vdwg.mxu0
  %v77 = vmax.f32 %v72, 0.0
  %v78 = vmax.f32 %v75, 0.0
  %v79 = vld [vmem:[%s3] sm:$0xff]
  %v80 = vld [vmem:[%s3 + $0x8] sm:$0xff]
  %v81 = vld [vmem:[%s3 + $0x10] sm:$0xff]
  %v82 = vld [vmem:[%s3 + $0x18] sm:$0xff]
  %v83 = vld [vmem:[%s4] sm:$0x1]
  %v85 = vperm.slane %v83, 0
  %vm87 = vcmask 261120
  %v89 = vsel %vm87, %v77, 0
  %v92 = vsel %vm87, %v78, 0
  %94 = vmatpush.msra.mxu0 0.0
  %95 = vmatpush.msra.mxu0 0.0
  %96 = vmatpush.msra.mxu0 0.0
  %97 = vmatpush.msra.mxu0 0.0
  %98 = vmatpush.msra.mxu0 0.0
  %99 = vmatpush.msra.mxu0 0.0
  %100 = vmatpush.msra.mxu0 0.0
  %101 = vmatpush.msra.mxu0 0.0
  %102 = vmatpush.msra.mxu0 0.0
  %103 = vmatpush.msra.mxu0 0.0
  %104 = vmatpush.msra.mxu0 0.0
  %105 = vmatpush.msra.mxu0 0.0
  %106 = vmatpush.msra.mxu0 %v82
  %107 = vmatpush.msra.mxu0 %v81
  %108 = vmatpush.msra.mxu0 %v80
  %109 = vmatpush.msra.mxu0 %v79
  %110 = vmatmul.f32.gmra.mxu0 %v89
  %v111 = vpop.f32.mrf.mxu0
  %v112 = vadd.f32 %v85, %v111
  %113 = vmatmul.f32.gmra.mxu0 %v92
  %v114 = vpop.f32.mrf.mxu0
  %v115 = vadd.f32 %v85, %v114
  %116 = vdwg.mxu0
  %v117 = vmax.f32 %v112, 0.0
  %v118 = vmax.f32 %v115, 0.0
  %v119 = vld [vmem:[%s5] sm:$0xff]
  %v120 = vld [vmem:[%s5 + $0x8] sm:$0xff]
  %v121 = vld [vmem:[%s6] sm:$0x1]
  %v123 = vperm.slane %v121, 0
  %vm125 = vcmask 130048
  %v127 = vsel %vm125, %v117, 0
  %v130 = vsel %vm125, %v118, 0
  %132 = vmatpush.msra.mxu0 0.0
  %133 = vmatpush.msra.mxu0 0.0
  %134 = vmatpush.msra.mxu0 0.0
  %135 = vmatpush.msra.mxu0 0.0
  %136 = vmatpush.msra.mxu0 0.0
  %137 = vmatpush.msra.mxu0 0.0
  %138 = vmatpush.msra.mxu0 0.0
  %139 = vmatpush.msra.mxu0 0.0
  %140 = vmatpush.msra.mxu0 0.0
  %141 = vmatpush.msra.mxu0 0.0
  %142 = vmatpush.msra.mxu0 0.0
  %143 = vmatpush.msra.mxu0 0.0
  %144 = vmatpush.msra.mxu0 0.0
  %145 = vmatpush.msra.mxu0 0.0
  %146 = vmatpush.msra.mxu0 %v120
  %147 = vmatpush.msra.mxu0 %v119
  %148 = vmatmul.f32.gmra.mxu0 %v127
  %v149 = vpop.f32.mrf.mxu0
  %v150 = vadd.f32 %v123, %v149
  %151 = vmatmul.f32.gmra.mxu0 %v130
  %v152 = vpop.f32.mrf.mxu0
  %v153 = vadd.f32 %v123, %v152
  %154 = vdwg.mxu0
  %vm155 = vcmask 48128
  %156 = vst.msk [vmem:[%s7] sm:$0xff] %vm155, %v150
  %157 = vst.msk [vmem:[%s7 + $0x8] sm:$0xff] %vm155, %v153
  // Predicated region
  $region30: #{tpu_custom_call.1} parent=0 // pred_check
    _
  $region31: #{tpu_custom_call.1} parent=0 // pred_check_branch
    %159 = sbr.rel (0) target = $region33
  $region32: #{tpu_custom_call.1} parent=0 // pred_region
    _
  $region33: #{tpu_custom_call.1} parent=0 // pred_fallthru
    _
  // Predicated region
  $region34: #{tpu_custom_call.1} parent=0 // pred_check
    _
  $region35: #{tpu_custom_call.1} parent=0 // pred_check_branch
    %161 = sbr.rel (0) target = $region37
  $region36: #{tpu_custom_call.1} parent=0 // pred_region
    _
  $region37: #{tpu_custom_call.1} parent=0 // pred_fallthru
    _

</llo_original>
